<compile_context>
chip_gen: v6e
topology: v6e:2x2x1
jax: 0.10.0
libtpu: 0.0.40
codegen_flags: <defaults>
</compile_context>

<pallas_src>
import functools
import math

import jax
import jax.numpy as jnp
from jax import lax
from jax.experimental import pallas as pl
from jax.experimental.pallas import tpu as pltpu

BN_EPS = 1e-5


def _lane_roll(x, s, hw):
    """shifted[:, p] = x[:, (p + s) % hw]  (out-of-row wrap values are masked by caller)."""
    i = s % hw
    if i == 0:
        return x
    return jnp.concatenate([x[:, i:], x[:, :i]], axis=1)


def mixed_op_kernel(x_ref, w_ref, o_ref, *, H, W):
    """Fused MixedOp for one batch element.

    x_ref : (CP, H*W) f32 VMEM   channel-padded input, spatial dims flattened on lanes
    w_ref : (CP, 11*CP) f32 VMEM combined op weights (bn + arch weights folded in)
    o_ref : (CP, H*W) f32 VMEM   output
    """
    CP, HW = x_ref.shape
    x = x_ref[...]

    # Per-lane (h, w) coordinates.  W is a power of two (asserted in wrapper).
    w_shift = W.bit_length() - 1
    lane = lax.broadcasted_iota(jnp.int32, (CP, HW), 1)
    hh = lane >> w_shift            # row index   0..H-1
    ww = lane & (W - 1)             # column index 0..W-1

    blocks = []
    pool_sum = jnp.zeros_like(x)
    for dy in (-1, 0, 1):
        if dy < 0:
            hv = hh > 0
        elif dy > 0:
            hv = hh < H - 1
        else:
            hv = None
        for dx in (-1, 0, 1):
            if dx < 0:
                wv = ww > 0
            elif dx > 0:
                wv = ww < W - 1
            else:
                wv = None
            if hv is None:
                valid = wv
            elif wv is None:
                valid = hv
            else:
                valid = hv & wv

            shifted = _lane_roll(x, dy * W + dx, HW)      # x[., h+dy, w+dx]
            sx = shifted if valid is None else jnp.where(valid, shifted, 0.0)
            pool_sum = pool_sum + sx                      # avg-pool numerator
            blocks.append(jnp.maximum(sx, 0.0))           # ReLU input for the convs

    # skip_connect block (identity on the raw, un-ReLU'd input).
    blocks.append(x)

    # avg_pool_3x3 with count_include_pad=False: per-pixel valid count in {4, 6, 9}.
    rows = 3.0 - (hh == 0).astype(jnp.float32) - (hh == H - 1).astype(jnp.float32)
    cols = 3.0 - (ww == 0).astype(jnp.float32) - (ww == W - 1).astype(jnp.float32)
    blocks.append(pool_sum / (rows * cols))

    rhs = jnp.concatenate(blocks, axis=0)                 # (11*CP, HW), tile-aligned
    # Single MXU matmul produces the whole mixed output; one dense store.
    o_ref[...] = jnp.dot(w_ref[...], rhs, preferred_element_type=jnp.float32)


def _build_combined_weight(weights, w1, w3, C, CP):
    """(CP, 11*CP) weight: 9 conv3x3 taps (+ conv1x1 in the centre), skip, pool.

    bn_scale and the architecture weights are folded in here (tiny arrays, free).
    weights[0] ('none' / Zero) contributes nothing.
    """
    bn_scale = 1.0 / math.sqrt(1.0 + BN_EPS)
    aw = weights.astype(jnp.float32)
    w1 = w1.astype(jnp.float32)
    w3 = w3.astype(jnp.float32)
    eye = jnp.eye(C, dtype=jnp.float32)

    blocks = []
    for ky in range(3):
        for kx in range(3):
            blk = (aw[3] * bn_scale) * w3[:, :, ky, kx]
            if ky == 1 and kx == 1:                       # centre tap == unshifted ReLU(x)
                blk = blk + (aw[2] * bn_scale) * w1       # fold conv1x1 in here
            blocks.append(blk)
    blocks.append(aw[1] * eye)                            # skip_connect
    blocks.append(aw[4] * eye)                            # avg_pool_3x3

    pad = ((0, CP - C), (0, CP - C))
    blocks = [jnp.pad(b, pad) for b in blocks]
    return jnp.concatenate(blocks, axis=1)                # (CP, 11*CP)


@jax.jit
def mixed_op(x, weights, w1, w3):
    """x: (N,C,H,W) f32, weights: (5,) f32, w1: (C,C) f32, w3: (C,C,3,3) f32."""
    N, C, H, W = x.shape
    assert W & (W - 1) == 0, "W must be a power of two (lane index math)"
    HW = H * W
    CP = -(-C // 8) * 8                                   # pad channels to full sublane tile

    x_flat = x.astype(jnp.float32).reshape(N, C, HW)
    if CP != C:
        x_flat = jnp.pad(x_flat, ((0, 0), (0, CP - C), (0, 0)))
    w_comb = _build_combined_weight(weights, w1, w3, C, CP)

    kernel = functools.partial(mixed_op_kernel, H=H, W=W)
    out = pl.pallas_call(
        kernel,
        out_shape=jax.ShapeDtypeStruct((N, CP, HW), jnp.float32),
        grid=(N,),
        in_specs=[
            pl.BlockSpec((None, CP, HW), lambda n: (n, 0, 0)),   # one batch per step
            pl.BlockSpec((CP, 11 * CP), lambda n: (0, 0)),       # combined weights (resident)
        ],
        out_specs=pl.BlockSpec((None, CP, HW), lambda n: (n, 0, 0)),
        compiler_params=pltpu.CompilerParams(
            dimension_semantics=("parallel",)),                  # shard batches across TCs (v7x)
    )(x_flat, w_comb)

    return out[:, :C, :].reshape(N, C, H, W)


def mixed_op_reference(x, weights, w1, w3):
    """Independent pure-JAX reference (lax convs / reduce_window)."""
    bn_scale = 1.0 / jnp.sqrt(1.0 + BN_EPS)
    rx = jax.nn.relu(x)
    dn = ("NCHW", "OIHW", "NCHW")
    c1 = lax.conv_general_dilated(rx, w1[:, :, None, None], (1, 1), "VALID",
                                  dimension_numbers=dn,
                                  precision=lax.Precision.HIGHEST) * bn_scale
    c3 = lax.conv_general_dilated(rx, w3, (1, 1), ((1, 1), (1, 1)),
                                  dimension_numbers=dn,
                                  precision=lax.Precision.HIGHEST) * bn_scale
    window = (1, 1, 3, 3)
    strides = (1, 1, 1, 1)
    pad = ((0, 0), (0, 0), (1, 1), (1, 1))
    psum = lax.reduce_window(x, 0.0, lax.add, window, strides, pad)
    pcnt = lax.reduce_window(jnp.ones_like(x), 0.0, lax.add, window, strides, pad)
    pool = psum / pcnt
    zero = jnp.zeros_like(x)
    return (weights[0] * zero + weights[1] * x + weights[2] * c1
            + weights[3] * c3 + weights[4] * pool)


if __name__ == "__main__":
    N, C, H, W = 2, 4, 16, 16

    key = jax.random.PRNGKey(0)
    kx, kw1, kw3, ka = jax.random.split(key, 4)
    x = jax.random.normal(kx, (N, C, H, W), jnp.float32)
    w1 = jax.random.normal(kw1, (C, C), jnp.float32) * 0.3           # Conv1x1 weight
    w3 = jax.random.normal(kw3, (C, C, 3, 3), jnp.float32) * 0.2     # Conv3x3 weight
    alphas = jax.random.normal(ka, (5,), jnp.float32)
    weights = jax.nn.softmax(alphas)                                 # arch weights

    out = jax.block_until_ready(mixed_op(x, weights, w1, w3))

    ref = mixed_op_reference(x, weights, w1, w3)
    assert out.shape == (N, C, H, W) and out.dtype == jnp.float32
    max_err = float(jnp.max(jnp.abs(out - ref)))
    assert jnp.allclose(out, ref, atol=2e-3, rtol=2e-3), max_err

    print("KERNEL_OK")
</pallas_src>

<mosaic_0001>
module attributes {stable_mosaic.version = 11 : i64} {
  func.func @mixed_op_kernel(%arg0: i32, %arg1: memref<1x8x256xf32, #tpu.memory_space<vmem>>, %arg2: memref<8x88xf32, #tpu.memory_space<vmem>>, %arg3: memref<1x8x256xf32, #tpu.memory_space<vmem>>) attributes {dimension_semantics = [#tpu.dimension_semantics<parallel>], iteration_bounds = array<i64: 2>, scalar_prefetch = 0 : i64, scratch_operands = 0 : i64, tpu.core_type = #tpu.core_type<tc>, window_params = [{transform_indices = @transform_0, window_bounds = array<i64: 1, 8, 256>}, {pipeline_mode = #tpu.pipeline_mode<synchronous>, transform_indices = @transform_1, window_bounds = array<i64: 8, 88>}, {transform_indices = @transform_2, window_bounds = array<i64: 1, 8, 256>}]} {
    %c0 = arith.constant 0 : index
    %c0_0 = arith.constant 0 : index
    %c0_1 = arith.constant 0 : index
    %0 = vector.load %arg1[%c0, %c0_0, %c0_1] : memref<1x8x256xf32, #tpu.memory_space<vmem>>, vector<1x8x256xf32>
    %1 = vector.shape_cast %0 : vector<1x8x256xf32> to vector<8x256xf32>
    %2 = tpu.iota {dimensions = array<i32: 1>} : vector<8x256xi32>
    %c4_i32 = arith.constant 4 : i32
    %3 = vector.broadcast %c4_i32 : i32 to vector<8x256xi32>
    %4 = arith.shrsi %2, %3 : vector<8x256xi32>
    %c15_i32 = arith.constant 15 : i32
    %5 = vector.broadcast %c15_i32 : i32 to vector<8x256xi32>
    %6 = arith.andi %2, %5 : vector<8x256xi32>
    %cst = arith.constant 0.000000e+00 : f32
    %7 = vector.broadcast %cst : f32 to vector<8x256xf32>
    %c0_i32 = arith.constant 0 : i32
    %8 = vector.broadcast %c0_i32 : i32 to vector<8x256xi32>
    %9 = arith.cmpi sgt, %4, %8 : vector<8x256xi32>
    %c0_i32_2 = arith.constant 0 : i32
    %10 = vector.broadcast %c0_i32_2 : i32 to vector<8x256xi32>
    %11 = arith.cmpi sgt, %6, %10 : vector<8x256xi32>
    %12 = arith.andi %9, %11 : vector<8x256xi1>
    %13 = vector.extract_strided_slice %1 {offsets = [0, 239], sizes = [8, 17], strides = [1, 1]} : vector<8x256xf32> to vector<8x17xf32>
    %14 = vector.extract_strided_slice %1 {offsets = [0, 0], sizes = [8, 239], strides = [1, 1]} : vector<8x256xf32> to vector<8x239xf32>
    %15 = tpu.concatenate %13, %14 in 1 : vector<8x17xf32>, vector<8x239xf32> -> vector<8x256xf32>
    %cst_3 = arith.constant 0.000000e+00 : f32
    %16 = vector.broadcast %cst_3 : f32 to vector<8x256xf32>
    %17 = arith.select %12, %15, %16 : vector<8x256xi1>, vector<8x256xf32>
    %18 = arith.addf %7, %17 : vector<8x256xf32>
    %cst_4 = arith.constant 0.000000e+00 : f32
    %19 = vector.broadcast %cst_4 : f32 to vector<8x256xf32>
    %20 = arith.maximumf %17, %19 : vector<8x256xf32>
    %21 = vector.extract_strided_slice %1 {offsets = [0, 240], sizes = [8, 16], strides = [1, 1]} : vector<8x256xf32> to vector<8x16xf32>
    %22 = vector.extract_strided_slice %1 {offsets = [0, 0], sizes = [8, 240], strides = [1, 1]} : vector<8x256xf32> to vector<8x240xf32>
    %23 = tpu.concatenate %21, %22 in 1 : vector<8x16xf32>, vector<8x240xf32> -> vector<8x256xf32>
    %cst_5 = arith.constant 0.000000e+00 : f32
    %24 = vector.broadcast %cst_5 : f32 to vector<8x256xf32>
    %25 = arith.select %9, %23, %24 : vector<8x256xi1>, vector<8x256xf32>
    %26 = arith.addf %18, %25 : vector<8x256xf32>
    %cst_6 = arith.constant 0.000000e+00 : f32
    %27 = vector.broadcast %cst_6 : f32 to vector<8x256xf32>
    %28 = arith.maximumf %25, %27 : vector<8x256xf32>
    %c15_i32_7 = arith.constant 15 : i32
    %29 = vector.broadcast %c15_i32_7 : i32 to vector<8x256xi32>
    %30 = arith.cmpi slt, %6, %29 : vector<8x256xi32>
    %31 = arith.andi %9, %30 : vector<8x256xi1>
    %32 = vector.extract_strided_slice %1 {offsets = [0, 241], sizes = [8, 15], strides = [1, 1]} : vector<8x256xf32> to vector<8x15xf32>
    %33 = vector.extract_strided_slice %1 {offsets = [0, 0], sizes = [8, 241], strides = [1, 1]} : vector<8x256xf32> to vector<8x241xf32>
    %34 = tpu.concatenate %32, %33 in 1 : vector<8x15xf32>, vector<8x241xf32> -> vector<8x256xf32>
    %cst_8 = arith.constant 0.000000e+00 : f32
    %35 = vector.broadcast %cst_8 : f32 to vector<8x256xf32>
    %36 = arith.select %31, %34, %35 : vector<8x256xi1>, vector<8x256xf32>
    %37 = arith.addf %26, %36 : vector<8x256xf32>
    %cst_9 = arith.constant 0.000000e+00 : f32
    %38 = vector.broadcast %cst_9 : f32 to vector<8x256xf32>
    %39 = arith.maximumf %36, %38 : vector<8x256xf32>
    %c0_i32_10 = arith.constant 0 : i32
    %40 = vector.broadcast %c0_i32_10 : i32 to vector<8x256xi32>
    %41 = arith.cmpi sgt, %6, %40 : vector<8x256xi32>
    %42 = vector.extract_strided_slice %1 {offsets = [0, 255], sizes = [8, 1], strides = [1, 1]} : vector<8x256xf32> to vector<8x1xf32>
    %43 = vector.extract_strided_slice %1 {offsets = [0, 0], sizes = [8, 255], strides = [1, 1]} : vector<8x256xf32> to vector<8x255xf32>
    %44 = tpu.concatenate %42, %43 in 1 : vector<8x1xf32>, vector<8x255xf32> -> vector<8x256xf32>
    %cst_11 = arith.constant 0.000000e+00 : f32
    %45 = vector.broadcast %cst_11 : f32 to vector<8x256xf32>
    %46 = arith.select %41, %44, %45 : vector<8x256xi1>, vector<8x256xf32>
    %47 = arith.addf %37, %46 : vector<8x256xf32>
    %cst_12 = arith.constant 0.000000e+00 : f32
    %48 = vector.broadcast %cst_12 : f32 to vector<8x256xf32>
    %49 = arith.maximumf %46, %48 : vector<8x256xf32>
    %50 = arith.addf %47, %1 : vector<8x256xf32>
    %cst_13 = arith.constant 0.000000e+00 : f32
    %51 = vector.broadcast %cst_13 : f32 to vector<8x256xf32>
    %52 = arith.maximumf %1, %51 : vector<8x256xf32>
    %c15_i32_14 = arith.constant 15 : i32
    %53 = vector.broadcast %c15_i32_14 : i32 to vector<8x256xi32>
    %54 = arith.cmpi slt, %6, %53 : vector<8x256xi32>
    %55 = vector.extract_strided_slice %1 {offsets = [0, 1], sizes = [8, 255], strides = [1, 1]} : vector<8x256xf32> to vector<8x255xf32>
    %56 = vector.extract_strided_slice %1 {offsets = [0, 0], sizes = [8, 1], strides = [1, 1]} : vector<8x256xf32> to vector<8x1xf32>
    %57 = tpu.concatenate %55, %56 in 1 : vector<8x255xf32>, vector<8x1xf32> -> vector<8x256xf32>
    %cst_15 = arith.constant 0.000000e+00 : f32
    %58 = vector.broadcast %cst_15 : f32 to vector<8x256xf32>
    %59 = arith.select %54, %57, %58 : vector<8x256xi1>, vector<8x256xf32>
    %60 = arith.addf %50, %59 : vector<8x256xf32>
    %cst_16 = arith.constant 0.000000e+00 : f32
    %61 = vector.broadcast %cst_16 : f32 to vector<8x256xf32>
    %62 = arith.maximumf %59, %61 : vector<8x256xf32>
    %c15_i32_17 = arith.constant 15 : i32
    %63 = vector.broadcast %c15_i32_17 : i32 to vector<8x256xi32>
    %64 = arith.cmpi slt, %4, %63 : vector<8x256xi32>
    %c0_i32_18 = arith.constant 0 : i32
    %65 = vector.broadcast %c0_i32_18 : i32 to vector<8x256xi32>
    %66 = arith.cmpi sgt, %6, %65 : vector<8x256xi32>
    %67 = arith.andi %64, %66 : vector<8x256xi1>
    %68 = vector.extract_strided_slice %1 {offsets = [0, 15], sizes = [8, 241], strides = [1, 1]} : vector<8x256xf32> to vector<8x241xf32>
    %69 = vector.extract_strided_slice %1 {offsets = [0, 0], sizes = [8, 15], strides = [1, 1]} : vector<8x256xf32> to vector<8x15xf32>
    %70 = tpu.concatenate %68, %69 in 1 : vector<8x241xf32>, vector<8x15xf32> -> vector<8x256xf32>
    %cst_19 = arith.constant 0.000000e+00 : f32
    %71 = vector.broadcast %cst_19 : f32 to vector<8x256xf32>
    %72 = arith.select %67, %70, %71 : vector<8x256xi1>, vector<8x256xf32>
    %73 = arith.addf %60, %72 : vector<8x256xf32>
    %cst_20 = arith.constant 0.000000e+00 : f32
    %74 = vector.broadcast %cst_20 : f32 to vector<8x256xf32>
    %75 = arith.maximumf %72, %74 : vector<8x256xf32>
    %76 = vector.extract_strided_slice %1 {offsets = [0, 16], sizes = [8, 240], strides = [1, 1]} : vector<8x256xf32> to vector<8x240xf32>
    %77 = vector.extract_strided_slice %1 {offsets = [0, 0], sizes = [8, 16], strides = [1, 1]} : vector<8x256xf32> to vector<8x16xf32>
    %78 = tpu.concatenate %76, %77 in 1 : vector<8x240xf32>, vector<8x16xf32> -> vector<8x256xf32>
    %cst_21 = arith.constant 0.000000e+00 : f32
    %79 = vector.broadcast %cst_21 : f32 to vector<8x256xf32>
    %80 = arith.select %64, %78, %79 : vector<8x256xi1>, vector<8x256xf32>
    %81 = arith.addf %73, %80 : vector<8x256xf32>
    %cst_22 = arith.constant 0.000000e+00 : f32
    %82 = vector.broadcast %cst_22 : f32 to vector<8x256xf32>
    %83 = arith.maximumf %80, %82 : vector<8x256xf32>
    %c15_i32_23 = arith.constant 15 : i32
    %84 = vector.broadcast %c15_i32_23 : i32 to vector<8x256xi32>
    %85 = arith.cmpi slt, %6, %84 : vector<8x256xi32>
    %86 = arith.andi %64, %85 : vector<8x256xi1>
    %87 = vector.extract_strided_slice %1 {offsets = [0, 17], sizes = [8, 239], strides = [1, 1]} : vector<8x256xf32> to vector<8x239xf32>
    %88 = vector.extract_strided_slice %1 {offsets = [0, 0], sizes = [8, 17], strides = [1, 1]} : vector<8x256xf32> to vector<8x17xf32>
    %89 = tpu.concatenate %87, %88 in 1 : vector<8x239xf32>, vector<8x17xf32> -> vector<8x256xf32>
    %cst_24 = arith.constant 0.000000e+00 : f32
    %90 = vector.broadcast %cst_24 : f32 to vector<8x256xf32>
    %91 = arith.select %86, %89, %90 : vector<8x256xi1>, vector<8x256xf32>
    %92 = arith.addf %81, %91 : vector<8x256xf32>
    %cst_25 = arith.constant 0.000000e+00 : f32
    %93 = vector.broadcast %cst_25 : f32 to vector<8x256xf32>
    %94 = arith.maximumf %91, %93 : vector<8x256xf32>
    %c0_i32_26 = arith.constant 0 : i32
    %95 = vector.broadcast %c0_i32_26 : i32 to vector<8x256xi32>
    %96 = arith.cmpi eq, %4, %95 : vector<8x256xi32>
    %97 = arith.extui %96 : vector<8x256xi1> to vector<8x256xi32>
    %98 = arith.sitofp %97 : vector<8x256xi32> to vector<8x256xf32>
    %cst_27 = arith.constant 3.000000e+00 : f32
    %99 = vector.broadcast %cst_27 : f32 to vector<8x256xf32>
    %100 = arith.subf %99, %98 : vector<8x256xf32>
    %c15_i32_28 = arith.constant 15 : i32
    %101 = vector.broadcast %c15_i32_28 : i32 to vector<8x256xi32>
    %102 = arith.cmpi eq, %4, %101 : vector<8x256xi32>
    %103 = arith.extui %102 : vector<8x256xi1> to vector<8x256xi32>
    %104 = arith.sitofp %103 : vector<8x256xi32> to vector<8x256xf32>
    %105 = arith.subf %100, %104 : vector<8x256xf32>
    %c0_i32_29 = arith.constant 0 : i32
    %106 = vector.broadcast %c0_i32_29 : i32 to vector<8x256xi32>
    %107 = arith.cmpi eq, %6, %106 : vector<8x256xi32>
    %108 = arith.extui %107 : vector<8x256xi1> to vector<8x256xi32>
    %109 = arith.sitofp %108 : vector<8x256xi32> to vector<8x256xf32>
    %cst_30 = arith.constant 3.000000e+00 : f32
    %110 = vector.broadcast %cst_30 : f32 to vector<8x256xf32>
    %111 = arith.subf %110, %109 : vector<8x256xf32>
    %c15_i32_31 = arith.constant 15 : i32
    %112 = vector.broadcast %c15_i32_31 : i32 to vector<8x256xi32>
    %113 = arith.cmpi eq, %6, %112 : vector<8x256xi32>
    %114 = arith.extui %113 : vector<8x256xi1> to vector<8x256xi32>
    %115 = arith.sitofp %114 : vector<8x256xi32> to vector<8x256xf32>
    %116 = arith.subf %111, %115 : vector<8x256xf32>
    %117 = arith.mulf %105, %116 : vector<8x256xf32>
    %118 = arith.divf %92, %117 : vector<8x256xf32>
    %119 = tpu.concatenate %20, %28, %39, %49, %52, %62, %75, %83, %94, %1, %118 in 0 : vector<8x256xf32>, vector<8x256xf32>, vector<8x256xf32>, vector<8x256xf32>, vector<8x256xf32>, vector<8x256xf32>, vector<8x256xf32>, vector<8x256xf32>, vector<8x256xf32>, vector<8x256xf32>, vector<8x256xf32> -> vector<88x256xf32>
    %c0_32 = arith.constant 0 : index
    %c0_33 = arith.constant 0 : index
    %120 = vector.load %arg2[%c0_32, %c0_33] : memref<8x88xf32, #tpu.memory_space<vmem>>, vector<8x88xf32>
    %cst_34 = arith.constant dense<0.000000e+00> : vector<8x256xf32>
    %121 = tpu.matmul %120, %119, %cst_34 {dimension_numbers = #tpu.dot_dimension_numbers<[1], [0], [0], [1], [0, 0, 1, 1], [], []>} : vector<8x88xf32>, vector<88x256xf32>, vector<8x256xf32> -> vector<8x256xf32>
    %c0_35 = arith.constant 0 : index
    %c0_36 = arith.constant 0 : index
    %c0_37 = arith.constant 0 : index
    %122 = vector.load %arg3[%c0_35, %c0_36, %c0_37] : memref<1x8x256xf32, #tpu.memory_space<vmem>>, vector<1x8x256xf32>
    %123 = vector.shape_cast %122 : vector<1x8x256xf32> to vector<8x256xf32>
    %124 = vector.shape_cast %121 : vector<8x256xf32> to vector<1x8x256xf32>
    tpu.vector_store %arg3[%c0_35, %c0_36, %c0_37], %124 {strides = array<i32>} : memref<1x8x256xf32, #tpu.memory_space<vmem>>, vector<1x8x256xf32>,
    return
  }
  func.func @transform_0(%arg0: i32) -> (i32, i32, i32) {
    %c0_i32 = arith.constant 0 : i32
    %c0_i32_0 = arith.constant 0 : i32
    %c0_i32_1 = arith.constant 0 : i32
    return %arg0, %c0_i32, %c0_i32_0 : i32, i32, i32
  }
  func.func @transform_1(%arg0: i32) -> (i32, i32) {
    %c0_i32 = arith.constant 0 : i32
    %c0_i32_0 = arith.constant 0 : i32
    %c0_i32_1 = arith.constant 0 : i32
    return %c0_i32, %c0_i32_0 : i32, i32
  }
  func.func @transform_2(%arg0: i32) -> (i32, i32, i32) {
    %c0_i32 = arith.constant 0 : i32
    %c0_i32_0 = arith.constant 0 : i32
    %c0_i32_1 = arith.constant 0 : i32
    return %arg0, %c0_i32, %c0_i32_0 : i32, i32, i32
  }
}

</mosaic_0001>

<llo_original>
// kernel: mixed_op.1
$region0: #{mixed_op.1}
  #allocation0 [shape = 'u32[]', space=smem, size = 0x4, offset = 0x4, fixed_abs, tag = 'smem constant byte address 0x4 - core index']
  #allocation1 [shape = 'u32[144,128]{1,0:T(1,128)}', space=vmem, size = 0x12000, scoped, tag = 'internal scratch']
  %s0 = inlined_call_operand.vmem [shape: f32[2,8,256], index: 0, kind: input, shape index: {}]
  %s1 = inlined_call_operand.vmem [shape: f32[8,88], index: 1, kind: input, shape index: {}]
  %s2 = inlined_call_operand.vmem [shape: f32[2,8,256], index: 2, kind: output, shape index: {}]
  %s3 = sld [smem:[#allocation0]]
  $region41: #{mixed_op.1} parent=0
    _
  %s5 = ssub.s32 1, %s3
  %s6 = scalar_select 0, %s5, %s3
  loop: start=0, step=1, limit=4
  $region2: #{mixed_op.1} parent=0 // loop_pre_header
    _
  $region3: #{mixed_op.1} parent=0 // loop_header
    %s8 = sphi 0, %s12
    %p9 = scmp.ge.s32.totalorder %s8, 4
    %s18 = sphi 0, %s20
    %s21 = sphi 0, %s18
    %s22 = sphi 0, %s21
    %s38 = sphi 0, %s22
    %s42 = sphi 0, %s42
    %s44 = sphi 0, %s42
    %s45 = sphi 0, %s44
    %s59 = sphi 0, %s45
    %s65 = sphi 0, %s67
    %s68 = sphi 0, %s65
    %s69 = sphi 0, %s68
    %s85 = sphi 0, %s69
  $region4: #{mixed_op.1} parent=0 // loop_header_branch
    %11 = sbr.rel (%p9) target = $region8
  $region5: #{mixed_op.1} parent=0 // loop_body
    %s13 = ssub.s32 %s8, 1
    %s14 = ssub.s32 %s8, 2
    %s15 = sadd.s32 %s8, 1
    %s16 = ssub.s32 %s8, %s15
    %p17 = scmp.eq.s32.totalorder %s16, 0
    %s19 = sadd.s32 %s18, 1
    %s20 = scalar_select %p17, %s18, %s19
    %p23 = pneg %p17
    %p24 = scmp.eq.s32.totalorder %s8, 1
    %p25 = por %p23, %p24
    %p26 = scmp.ne.s32.totalorder %s18, %s21
    %p27 = scmp.eq.s32.totalorder %s8, 0
    %p28 = por %p26, %p27
    %p29 = scmp.ne.s32.totalorder %s18, %s21
    %p30 = scmp.eq.s32.totalorder %s13, 1
    %p31 = por %p29, %p30
    %p32 = scmp.ne.s32.totalorder %s21, %s22
    %p33 = scmp.eq.s32.totalorder %s13, 0
    %p34 = por %p32, %p33
    %p35 = scmp.ne.s32.totalorder %s21, %s22
    %p36 = scmp.eq.s32.totalorder %s14, 1
    %p37 = por %p35, %p36
    %p39 = scmp.ne.s32.totalorder %s22, %s38
    %p40 = scmp.eq.s32.totalorder %s14, 0
    %p41 = por %p39, %p40
    %s43 = sadd.s32 %s42, 1
    %p46 = scmp.eq.s32.totalorder %s8, 1
    %p47 = scmp.ne.s32.totalorder %s42, %s44
    %p48 = scmp.eq.s32.totalorder %s8, 0
    %p49 = por %p47, %p48
    %p50 = scmp.ne.s32.totalorder %s42, %s44
    %p51 = scmp.eq.s32.totalorder %s13, 1
    %p52 = por %p50, %p51
    %p53 = scmp.ne.s32.totalorder %s44, %s45
    %p54 = scmp.eq.s32.totalorder %s13, 0
    %p55 = por %p53, %p54
    %p56 = scmp.ne.s32.totalorder %s44, %s45
    %p57 = scmp.eq.s32.totalorder %s14, 1
    %p58 = por %p56, %p57
    %p60 = scmp.ne.s32.totalorder %s45, %s59
    %p61 = scmp.eq.s32.totalorder %s14, 0
    %p62 = por %p60, %p61
    %s63 = ssub.s32 %s8, %s15
    %p64 = scmp.eq.s32.totalorder %s63, 0
    %s66 = sadd.s32 %s65, 1
    %s67 = scalar_select %p64, %s65, %s66
    %p70 = pneg %p64
    %p71 = scmp.eq.s32.totalorder %s8, 1
    %p72 = por %p70, %p71
    %p73 = scmp.ne.s32.totalorder %s65, %s68
    %p74 = scmp.eq.s32.totalorder %s8, 0
    %p75 = por %p73, %p74
    %p76 = scmp.ne.s32.totalorder %s65, %s68
    %p77 = scmp.eq.s32.totalorder %s13, 1
    %p78 = por %p76, %p77
    %p79 = scmp.ne.s32.totalorder %s68, %s69
    %p80 = scmp.eq.s32.totalorder %s13, 0
    %p81 = por %p79, %p80
    %p82 = scmp.ne.s32.totalorder %s68, %s69
    %p83 = scmp.eq.s32.totalorder %s14, 1
    %p84 = por %p82, %p83
    %p86 = scmp.ne.s32.totalorder %s69, %s85
    %p87 = scmp.eq.s32.totalorder %s14, 0
    %p88 = por %p86, %p87
    %p89 = scmp.le.s32.totalorder 1, %s8
    %p90 = scmp.lt.s32.totalorder %s8, 3
    %p91 = pnand %p89, %p90
    %p92 = pneg %p91
    // Predicated region
    $region9: #{mixed_op.1} parent=5 // pred_check
      _
    $region10: #{mixed_op.1} parent=5 // pred_check_branch
      %94 = sbr.rel (%p91) target = $region12
    $region11: #{mixed_op.1} parent=5 // pred_region
      %s95 = ssub.s32 %s8, 1
      // Predicated region
      $region13: #{mixed_op.1} parent=11 // pred_check
        %p96 = pneg %p55
      $region14: #{mixed_op.1} parent=11 // pred_check_branch
        %98 = sbr.rel (%p96) target = $region16
      $region15: #{mixed_op.1} parent=11 // pred_region
        _
      $region16: #{mixed_op.1} parent=11 // pred_fallthru
        _
    $region12: #{mixed_op.1} parent=5 // pred_fallthru
      _
    %p99 = scmp.lt.s32.totalorder %s8, 2
    // Predicated region
    $region17: #{mixed_op.1} parent=5 // pred_check
      %p100 = pneg %p99
    $region18: #{mixed_op.1} parent=5 // pred_check_branch
      %102 = sbr.rel (%p100) target = $region20
    $region19: #{mixed_op.1} parent=5 // pred_region
      // Predicated region
      $region21: #{mixed_op.1} parent=19 // pred_check
        %p103 = pneg %p28
      $region22: #{mixed_op.1} parent=19 // pred_check_branch
        %105 = sbr.rel (%p103) target = $region24
      $region23: #{mixed_op.1} parent=19 // pred_region
        %p106 = scmp.lt.s32.totalorder %s8, 1
        %s107 = scalar_select %p106, %s8, 1
        %s108 = smul.addr %s107, 2
        %s109 = smul.addr %s108, 8
        %s110 = scalar_lea.vmem %s0, %s109
      $region24: #{mixed_op.1} parent=19 // pred_fallthru
        _
    $region20: #{mixed_op.1} parent=5 // pred_fallthru
      _
    %p111 = scmp.le.s32.totalorder 1, %s8
    %p112 = scmp.lt.s32.totalorder %s8, 3
    %p113 = pnand %p111, %p112
    %p114 = pneg %p113
    // Predicated region
    $region25: #{mixed_op.1} parent=5 // pred_check
      _
    $region26: #{mixed_op.1} parent=5 // pred_check_branch
      %116 = sbr.rel (%p113) target = $region28
    $region27: #{mixed_op.1} parent=5 // pred_region
      %s117 = ssub.s32 %s8, 1
      %p118 = scmp.lt.s32.totalorder %s13, 1
      %s119 = scalar_select %p118, %s13, 1
      %s120 = smul.addr %s119, 2
      %s121 = smul.addr %s120, 8
      %s122 = scalar_lea.vmem %s0, %s121
      %p123 = pneg %p34
      %p124 = pneg %p31
      %p125 = pneg %p55
      %p126 = pneg %p52
      %p127 = pneg %p81
      %p128 = pneg %p78
      %p129 = scmp.lt.s32.totalorder %s13, 1
      %s130 = scalar_select %p129, %s13, 1
      %s131 = smul.addr %s130, 2
      %s132 = smul.addr %s131, 8
      %s133 = scalar_lea.vmem %s2, %s132
      %p134 = scmp.lt.s32.totalorder %s13, 1
      %s135 = scalar_select %p134, %s13, 1
      %s136 = smul.addr %s135, 2
      %s137 = smul.addr %s136, 8
      %s138 = scalar_lea.vmem %s0, %s137
      %p139 = scmp.lt.s32.totalorder %s13, 1
      %s140 = scalar_select %p139, %s13, 1
      %s141 = smul.addr %s140, 2
      %s142 = smul.addr %s141, 8
      %s143 = scalar_lea.vmem %s2, %s142
      %v144 = vld [vmem:[%s138] sm:$0xff]
      %v145 = vld [vmem:[%s138 + $0x8] sm:$0xff]
      %v146 = vlaneseq
      %v147 = vand.u32 %v146, 127
      %v148 = vadd.s32 %v147, 128
      %v149 = vshra.s32 %v147, 4
      %v150 = vshra.s32 %v148, 4
      %v151 = vand.u32 %v147, 15
      %v152 = vand.u32 %v148, 15
      %vm153 = vcmp.gt.s32.totalorder %v149, 0
      %vm154 = vcmp.gt.s32.totalorder %v150, 0
      %vm155 = vcmp.gt.s32.totalorder %v151, 0
      %vm156 = vcmp.gt.s32.totalorder %v152, 0
      %vm157 = vmand %vm153, %vm155
      %vm158 = vmand %vm154, %vm156
      %160 = vrot.lane.b32.xlu0 %v145, 17
      %v161 = vpop.permute.xlu0 %160
      %164 = vrot.lane.b32.xlu0 %v144, 17
      %v165 = vpop.permute.xlu0 %164
      %vm166 = vcmask 138240
      %v167 = vsel %vm166, %v165, %v161
      %v170 = vsel %vm166, %v161, %v165
      %v171 = vsel %vm157, %v170, 0.0
      %v172 = vsel %vm158, %v167, 0.0
      %v173 = vadd.f32 %v171, 0.0
      %v174 = vadd.f32 %v172, 0.0
      %v175 = vmax.f32 %v171, 0.0
      %v176 = vmax.f32 %v172, 0.0
      %177 = vrot.lane.b32.xlu0 %v145, 16
      %v178 = vpop.permute.xlu0 %177
      %180 = vrot.lane.b32.xlu0 %v144, 16
      %v181 = vpop.permute.xlu0 %180
      %vm182 = vcmask 130048
      %v183 = vsel %vm182, %v181, %v178
      %v186 = vsel %vm182, %v178, %v181
      %v187 = vsel %vm153, %v186, 0.0
      %v188 = vsel %vm154, %v183, 0.0
      %v189 = vadd.f32 %v173, %v187
      %v190 = vadd.f32 %v174, %v188
      %v191 = vmax.f32 %v187, 0.0
      %v192 = vmax.f32 %v188, 0.0
      %vm193 = vcmp.lt.s32.totalorder %v151, 15
      %vm194 = vcmp.lt.s32.totalorder %v152, 15
      %vm195 = vmand %vm153, %vm193
      %vm196 = vmand %vm154, %vm194
      %197 = vrot.lane.b32.xlu0 %v145, 15
      %v198 = vpop.permute.xlu0 %197
      %200 = vrot.lane.b32.xlu0 %v144, 15
      %v201 = vpop.permute.xlu0 %200
      %vm202 = vcmask 121856
      %v203 = vsel %vm202, %v201, %v198
      %v206 = vsel %vm202, %v198, %v201
      %v207 = vsel %vm195, %v206, 0.0
      %v208 = vsel %vm196, %v203, 0.0
      %v209 = vadd.f32 %v189, %v207
      %v210 = vadd.f32 %v190, %v208
      %v211 = vmax.f32 %v207, 0.0
      %v212 = vmax.f32 %v208, 0.0
      %213 = vrot.lane.b32.xlu0 %v145, 1
      %v214 = vpop.permute.xlu0 %213
      %216 = vrot.lane.b32.xlu0 %v144, 1
      %v217 = vpop.permute.xlu0 %216
      %vm218 = vcmask 7168
      %v219 = vsel %vm218, %v217, %v214
      %v222 = vsel %vm218, %v214, %v217
      %v223 = vsel %vm155, %v222, 0.0
      %v224 = vsel %vm156, %v219, 0.0
      %v225 = vadd.f32 %v209, %v223
      %v226 = vadd.f32 %v210, %v224
      %v227 = vmax.f32 %v223, 0.0
      %v228 = vmax.f32 %v224, 0.0
      %v229 = vadd.f32 %v225, %v144
      %v230 = vadd.f32 %v226, %v145
      %v231 = vmax.f32 %v144, 0.0
      %v232 = vmax.f32 %v145, 0.0
      %233 = vrot.lane.b32.xlu0 %v144, 127
      %v234 = vpop.permute.xlu0 %233
      %235 = vrot.lane.b32.xlu0 %v145, 127
      %v236 = vpop.permute.xlu0 %235
      %vm237 = vcmask 1039360
      %v238 = vsel %vm237, %v234, %v236
      %v242 = vsel %vm237, %v236, %v234
      %v243 = vsel %vm193, %v238, 0.0
      %v244 = vsel %vm194, %v242, 0.0
      %v245 = vadd.f32 %v229, %v243
      %v246 = vadd.f32 %v230, %v244
      %v247 = vmax.f32 %v243, 0.0
      %v248 = vmax.f32 %v244, 0.0
      %vm249 = vcmp.lt.s32.totalorder %v149, 15
      %vm250 = vcmp.lt.s32.totalorder %v150, 15
      %vm251 = vmand %vm249, %vm155
      %vm252 = vmand %vm250, %vm156
      %253 = vrot.lane.b32.xlu0 %v144, 113
      %v254 = vpop.permute.xlu0 %253
      %255 = vrot.lane.b32.xlu0 %v145, 113
      %v256 = vpop.permute.xlu0 %255
      %vm257 = vcmask 924672
      %v258 = vsel %vm257, %v254, %v256
      %v262 = vsel %vm257, %v256, %v254
      %v263 = vsel %vm251, %v258, 0.0
      %v264 = vsel %vm252, %v262, 0.0
      %v265 = vadd.f32 %v245, %v263
      %v266 = vadd.f32 %v246, %v264
      %v267 = vmax.f32 %v263, 0.0
      %v268 = vmax.f32 %v264, 0.0
      %269 = vrot.lane.b32.xlu0 %v144, 112
      %v270 = vpop.permute.xlu0 %269
      %271 = vrot.lane.b32.xlu0 %v145, 112
      %v272 = vpop.permute.xlu0 %271
      %vm273 = vcmask 916480
      %v274 = vsel %vm273, %v270, %v272
      %v278 = vsel %vm273, %v272, %v270
      %v279 = vsel %vm249, %v274, 0.0
      %v280 = vsel %vm250, %v278, 0.0
      %v281 = vadd.f32 %v265, %v279
      %v282 = vadd.f32 %v266, %v280
      %v283 = vmax.f32 %v279, 0.0
      %v284 = vmax.f32 %v280, 0.0
      %vm285 = vmand %vm249, %vm193
      %vm286 = vmand %vm250, %vm194
      %287 = vrot.lane.b32.xlu0 %v144, 111
      %v288 = vpop.permute.xlu0 %287
      %289 = vrot.lane.b32.xlu0 %v145, 111
      %v290 = vpop.permute.xlu0 %289
      %vm291 = vcmask 908288
      %v292 = vsel %vm291, %v288, %v290
      %v296 = vsel %vm291, %v290, %v288
      %v297 = vsel %vm285, %v292, 0.0
      %v298 = vsel %vm286, %v296, 0.0
      %v299 = vadd.f32 %v281, %v297
      %v300 = vadd.f32 %v282, %v298
      %v301 = vmax.f32 %v297, 0.0
      %v302 = vmax.f32 %v298, 0.0
      %vm303 = vcmp.eq.s32.totalorder %v149, 0
      %vm304 = vcmp.eq.s32.totalorder %v150, 0
      %v305 = vsel %vm303, 1, 0
      %v306 = vsel %vm304, 1, 0
      %v307 = vcvt.s32.f32 %v305
      %v308 = vcvt.s32.f32 %v306
      %v309 = vsub.f32 3.0, %v307
      %v310 = vsub.f32 3.0, %v308
      %vm311 = vcmp.eq.s32.totalorder %v149, 15
      %vm312 = vcmp.eq.s32.totalorder %v150, 15
      %v313 = vsel %vm311, 1, 0
      %v314 = vsel %vm312, 1, 0
      %v315 = vcvt.s32.f32 %v313
      %v316 = vcvt.s32.f32 %v314
      %v317 = vsub.f32 %v309, %v315
      %v318 = vsub.f32 %v310, %v316
      %vm319 = vcmp.eq.s32.totalorder %v151, 0
      %vm320 = vcmp.eq.s32.totalorder %v152, 0
      %v321 = vsel %vm319, 1, 0
      %v322 = vsel %vm320, 1, 0
      %v323 = vcvt.s32.f32 %v321
      %v324 = vcvt.s32.f32 %v322
      %v325 = vsub.f32 3.0, %v323
      %v326 = vsub.f32 3.0, %v324
      %vm327 = vcmp.eq.s32.totalorder %v151, 15
      %vm328 = vcmp.eq.s32.totalorder %v152, 15
      %v329 = vsel %vm327, 1, 0
      %v330 = vsel %vm328, 1, 0
      %v331 = vcvt.s32.f32 %v329
      %v332 = vcvt.s32.f32 %v330
      %v333 = vsub.f32 %v325, %v331
      %v334 = vsub.f32 %v326, %v332
      %v335 = vmul.f32 %v317, %v333
      %v336 = vmul.f32 %v318, %v334
      %v337 = vrcp.pop %v335
      %v338 = vmul.f32 %v299, %v337
      %v339 = vrcp.pop %v336
      %v340 = vmul.f32 %v300, %v339
      %v341 = vld [vmem:[%s1] sm:$0xff]
      %vm342 = vcmask 719872
      %v344 = vsel %vm342, %v341, 0
      %346 = vmatprep.subr.mxu0 0.0
      %347 = vmatpush1.msra.mxu0 0.0
      %348 = vmatprep.subr.mxu0 0.0
      %349 = vmatpush1.msra.mxu0 0.0
      %350 = vmatprep.subr.mxu0 0.0
      %351 = vmatpush1.msra.mxu0 0.0
      %352 = vmatprep.subr.mxu0 0.0
      %353 = vmatpush1.msra.mxu0 0.0
      %354 = vmatprep.subr.mxu0 0.0
      %355 = vmatpush1.msra.mxu0 0.0
      %356 = vmatprep.subr.mxu0 %v340
      %357 = vmatpush1.msra.mxu0 %v338
      %358 = vmatprep.subr.mxu0 %v145
      %359 = vmatpush1.msra.mxu0 %v144
      %360 = vmatprep.subr.mxu0 %v302
      %361 = vmatpush1.msra.mxu0 %v301
      %362 = vmatprep.subr.mxu0 %v284
      %363 = vmatpush1.msra.mxu0 %v283
      %364 = vmatprep.subr.mxu0 %v268
      %365 = vmatpush1.msra.mxu0 %v267
      %366 = vmatprep.subr.mxu0 %v248
      %367 = vmatpush1.msra.mxu0 %v247
      %368 = vmatprep.subr.mxu0 %v232
      %369 = vmatpush1.msra.mxu0 %v231
      %370 = vmatprep.subr.mxu0 %v228
      %371 = vmatpush1.msra.mxu0 %v227
      %372 = vmatprep.subr.mxu0 %v212
      %373 = vmatpush1.msra.mxu0 %v211
      %374 = vmatprep.subr.mxu0 %v192
      %375 = vmatpush1.msra.mxu0 %v191
      %376 = vmatprep.subr.mxu0 %v176
      %377 = vmatpush1.msra.mxu0 %v175
      %378 = vmatprep.subr.mxu0 0.0
      %379 = vmatpush2.msra.mxu0 0.0
      %380 = vmatprep.subr.mxu0 0.0
      %381 = vmatpush2.msra.mxu0 0.0
      %382 = vmatprep.subr.mxu0 0.0
      %383 = vmatpush2.msra.mxu0 0.0
      %384 = vmatprep.subr.mxu0 0.0
      %385 = vmatpush2.msra.mxu0 0.0
      %386 = vmatprep.subr.mxu0 0.0
      %387 = vmatpush2.msra.mxu0 0.0
      %388 = vmatprep.subr.mxu0 0.0
      %389 = vmatpush2.msra.mxu0 0.0
      %390 = vmatprep.subr.mxu0 0.0
      %391 = vmatpush2.msra.mxu0 0.0
      %392 = vmatprep.subr.mxu0 0.0
      %393 = vmatpush2.msra.mxu0 0.0
      %394 = vmatprep.subr.mxu0 0.0
      %395 = vmatpush2.msra.mxu0 0.0
      %396 = vmatprep.subr.mxu0 0.0
      %397 = vmatpush2.msra.mxu0 0.0
      %398 = vmatprep.subr.mxu0 0.0
      %399 = vmatpush2.msra.mxu0 0.0
      %400 = vmatprep.subr.mxu0 0.0
      %401 = vmatpush2.msra.mxu0 0.0
      %402 = vmatprep.subr.mxu0 0.0
      %403 = vmatpush2.msra.mxu0 0.0
      %404 = vmatprep.subr.mxu0 0.0
      %405 = vmatpush2.msra.mxu0 0.0
      %406 = vmatprep.subr.mxu0 0.0
      %407 = vmatpush2.msra.mxu0 0.0
      %408 = vmatprep.subr.mxu0 0.0
      %409 = vmatpush2.msra.mxu0 0.0
      %410 = vmatprep.mubr.f32.mxu0 0.0
      %411 = vmatmul.mubr.f32.gmra.mxu0 %v344
      %v412 = vpop.f32.mrf.mxu0
      %v413 = vadd.f32 0.0, %v412
      %v414 = vpop.f32.mrf.mxu0
      %v415 = vadd.f32 0.0, %v414
      %416 = vdwg.mxu0
      %417 = vst [vmem:[%s143] sm:$0xff] %v413
      %418 = vst [vmem:[%s143 + $0x8] sm:$0xff] %v415
      %p419 = scmp.lt.s32.totalorder %s13, 1
      %s420 = scalar_select %p419, %s13, 1
      %s421 = smul.addr %s420, 2
      %s422 = smul.addr %s421, 8
      %s423 = scalar_lea.vmem %s2, %s422
      // Predicated region
      $region29: #{mixed_op.1} parent=27 // pred_check
        %p424 = pneg %p78
      $region30: #{mixed_op.1} parent=27 // pred_check_branch
        %426 = sbr.rel (%p424) target = $region32
      $region31: #{mixed_op.1} parent=27 // pred_region
        _
      $region32: #{mixed_op.1} parent=27 // pred_fallthru
        _
    $region28: #{mixed_op.1} parent=5 // pred_fallthru
      _
    %p427 = scmp.le.s32.totalorder 2, %s8
    // Predicated region
    $region33: #{mixed_op.1} parent=5 // pred_check
      %p428 = pneg %p427
    $region34: #{mixed_op.1} parent=5 // pred_check_branch
      %430 = sbr.rel (%p428) target = $region36
    $region35: #{mixed_op.1} parent=5 // pred_region
      %s431 = ssub.s32 %s8, 2
      // Predicated region
      $region37: #{mixed_op.1} parent=35 // pred_check
        %p432 = pneg %p84
      $region38: #{mixed_op.1} parent=35 // pred_check_branch
        %434 = sbr.rel (%p432) target = $region40
      $region39: #{mixed_op.1} parent=35 // pred_region
        %p435 = scmp.lt.s32.totalorder %s14, 1
        %s436 = scalar_select %p435, %s14, 1
        %s437 = smul.addr %s436, 2
        %s438 = smul.addr %s437, 8
        %s439 = scalar_lea.vmem %s2, %s438
      $region40: #{mixed_op.1} parent=35 // pred_fallthru
        _
    $region36: #{mixed_op.1} parent=5 // pred_fallthru
      _
  $region6: #{mixed_op.1} parent=0 // loop_footer
    %s12 = sadd.s32 1, %s8
  $region7: #{mixed_op.1} parent=0 // loop_footer_branch
    %7 = sbr.rel target = $region3
  $region8: #{mixed_op.1} parent=0 // loop_exit
    _

</llo_original>
